<compile_context>
chip_gen: v6e
topology: v6e:2x2x1
jax: 0.10.0
libtpu: 0.0.40
codegen_flags: <defaults>
</compile_context>

<pallas_src>
import functools
import math

import jax
import jax.numpy as jnp
from jax import lax
from jax.experimental import pallas as pl
from jax.experimental.pallas import tpu as pltpu


def _round_up(x, m):
    return (x + m - 1) // m * m


def _cll_tile_kernel(pred_ref, tgt_ref, invk_ref, loss_ref, *,
                     off_delta, tgt_delta, batch, tile_b, need_row_mask):
    pred = pred_ref[...]                     # [TB, C] f32 (streamed, double-buffered)
    tgt = tgt_ref[...]                       # [TB, 1] i32 (streamed)
    invk_all = invk_ref[...]                 # [C, C]  f32 (resident, single-buffered)

    TB, C = pred.shape

    # one-hot(target) on the VPU: class iota over the lane axis vs target column.
    cls_iota = lax.broadcasted_iota(jnp.int32, (TB, C), 1)
    oh = cls_iota == tgt                                               # [TB, C] bool
    oh_f = oh.astype(jnp.float32)

    # Row gather of the precomputed 1/(L*sigma*||kW_t - kW_j||) matrix on the MXU.
    inv_k = jnp.dot(oh_f, invk_all, preferred_element_type=jnp.float32)  # [TB, C]

    # gather(pred, target); exact sum of one value and exact zeros, so
    # (pred - wx_t) is exactly 0 at the target column and the target logit is
    # exactly tgt_delta (no extra select / reduce needed for it).
    wx_t = jnp.sum(oh_f * pred, axis=1, keepdims=True)                 # [TB, 1]
    delta = jnp.where(oh, tgt_delta, off_delta)                        # delta / sigma
    wx_it = (pred - wx_t) * inv_k + delta                              # [TB, C] margin logits

    # CrossEntropy (mean handled in the wrapper).
    m = jnp.max(wx_it, axis=1, keepdims=True)
    lse = m + jnp.log(jnp.sum(jnp.exp(wx_it - m), axis=1, keepdims=True))
    per_sample = lse - tgt_delta                                       # [TB, 1]

    if need_row_mask:
        row = lax.broadcasted_iota(jnp.int32, (TB, 1), 0) + pl.program_id(0) * tile_b
        per_sample = jnp.where(row < batch, per_sample, 0.0)

    # Lane-dense (8, 128) per-tile partial sum -> unmasked vector store.
    loss_ref[...] = jnp.full(loss_ref.shape, jnp.sum(per_sample), dtype=jnp.float32)


def cll_forward(prediction, target, kW, *, epsilon, err_quantile, add_epsilon,
                onesided, L_val, lambda_=0.0, tile_b=None):
    """CLL.forward: prediction [B,C] f32, target [B] i32, kW [C,D] f32 -> scalar loss."""
    B, C = prediction.shape
    Cw, D = kW.shape
    assert Cw == C

    # icdf(y) = log(y / (1 - y)) of the logistic distribution (host-side scalars).
    icdf = lambda y: math.log(y / (1.0 - y))
    Q = icdf(1.0 - err_quantile + err_quantile / 2.0) - icdf(err_quantile / 2.0)
    sigma = 2.0 * epsilon / Q

    # Fold all scalar factors host-side.
    inv_Lsig = 1.0 / (float(L_val) * sigma)
    off_delta = float(add_epsilon) / sigma
    tgt_delta = 0.0 if onesided else -float(add_epsilon) / sigma

    if tile_b is None:
        # v5e: 4x128 MXU + 1 vst slot -> 128; v6e/v7x: 2x256 MXU -> 256.
        kind = jax.devices()[0].device_kind.lower()
        tile_b = 128 if ("v5 lite" in kind or "v5e" in kind) else 256
    TB = _round_up(min(int(tile_b), _round_up(B, 8)), 8)
    B_pad = _round_up(B, TB)
    grid = B_pad // TB

    pred = prediction.astype(jnp.float32)
    tgt = target.astype(jnp.int32).reshape(B, 1)
    if B_pad != B:
        pred = jnp.pad(pred, ((0, B_pad - B), (0, 0)))
        tgt = jnp.pad(tgt, ((0, B_pad - B), (0, 0)))

    # Batch-independent precompute: pairwise distances of kW rows, done once in
    # the wrapper with the direct (a-b)^2 form.  All scalar factors are folded
    # in so the kernel's gather matmul directly yields 1/(L*sigma*K).
    kw = kW.astype(jnp.float32)
    diff = kw[:, None, :] - kw[None, :, :]                       # [C, C, D]
    ksq = jnp.sum(diff * diff, axis=-1)                          # [C, C]
    eye = jnp.eye(C, dtype=bool)
    # eps clamp guards duplicate / near-duplicate rows (reference would produce
    # ~inf logits there; the kernel caps them — benign and documented).
    invk = inv_Lsig / jnp.sqrt(jnp.maximum(ksq, 1e-12))
    # Diagonal: reference uses K = 1 (* L) there, i.e. exactly inv_Lsig; the
    # target column is multiplied by an exact 0 in the kernel anyway.
    invk = jnp.where(eye, inv_Lsig, invk).astype(jnp.float32)

    kernel = functools.partial(
        _cll_tile_kernel,
        off_delta=float(off_delta), tgt_delta=float(tgt_delta),
        batch=B, tile_b=TB, need_row_mask=(B_pad != B))

    # Explicit scoped-VMEM budget: resident invK (single-buffered) + double-
    # buffered streamed tiles + ~8 live [TB,C] f32 temporaries + output slab,
    # with 2x headroom; floor 16 MiB, cap below v7x's 64 MiB physical per TC.
    est = C * C * 4 + 2 * TB * (C + 1) * 4 + 8 * TB * C * 4 + 2 * 8 * 128 * 4
    vmem_limit = int(min(max(2 * est + (4 << 20), 16 << 20), 56 << 20))

    def make_call(single_buffer_resident):
        resident_kw = (dict(pipeline_mode=pl.Buffered(1))
                       if single_buffer_resident else {})
        return pl.pallas_call(
            kernel,
            out_shape=jax.ShapeDtypeStruct((grid, 8, 128), jnp.float32),
            grid=(grid,),
            in_specs=[
                pl.BlockSpec((TB, C), lambda i: (i, 0)),               # prediction tile
                pl.BlockSpec((TB, 1), lambda i: (i, 0)),               # target tile
                pl.BlockSpec((C, C), lambda i: (0, 0), **resident_kw),  # invK (resident)
            ],
            out_specs=pl.BlockSpec((1, 8, 128), lambda i: (i, 0, 0)),
            compiler_params=pltpu.CompilerParams(
                dimension_semantics=("parallel",),                     # batch tiles across TCs
                vmem_limit_bytes=vmem_limit),
        )

    try:
        loss_parts = make_call(True)(pred, tgt, invk)
    except Exception:
        # Fallback: keep default double-buffering if single buffering of the
        # resident operand is rejected by this jax/libtpu version.
        loss_parts = make_call(False)(pred, tgt, invk)

    loss = jnp.sum(loss_parts[:, 0, 0]) / B                      # CE reduction='mean'
    if lambda_ != 0.0:
        # K_tj.max() = L * sqrt(max_b max_j ||kW_{t_b} - kW_j||^2), diag treated as 1.
        # Computed wrapper-side from per-class row maxima, gathered with the
        # *unpadded* targets (no padded-row leak into the max).
        rowmax_sq = jnp.max(jnp.where(eye, 1.0, ksq), axis=1)    # [C]
        k_max = float(L_val) * jnp.sqrt(jnp.max(rowmax_sq[target]))
        loss = loss + lambda_ * k_max ** 2
    return loss


def _reference(prediction, target, kW, *, epsilon, err_quantile, add_epsilon,
               onesided, L_val, lambda_=0.0):
    # Pure-JAX mirror of the PyTorch forward, for a correctness check.
    B, C = prediction.shape
    kW_t = kW[target]                                   # [B, D]
    kW_tj = kW_t[:, :, None] - kW.T[None]               # [B, D, C]
    K_tj = jnp.sqrt(jnp.sum(kW_tj ** 2, axis=1))        # [B, C]
    K_tj = K_tj.at[jnp.arange(B), target].set(1.0)
    K_tj = K_tj * L_val

    icdf = lambda y: math.log(y / (1.0 - y))
    Q = icdf(1.0 - err_quantile + err_quantile / 2.0) - icdf(err_quantile / 2.0)
    sigma = 2.0 * epsilon / Q

    wx_t = prediction[jnp.arange(B), target][:, None]
    wx_it = (prediction - wx_t) / K_tj
    delta = jnp.full_like(prediction, add_epsilon)
    delta = delta.at[jnp.arange(B), target].set(0.0 if onesided else -add_epsilon)
    wx_it = (wx_it + delta) / sigma

    lse = jax.scipy.special.logsumexp(wx_it, axis=1)
    ce = jnp.mean(lse - wx_it[jnp.arange(B), target])
    if lambda_ != 0.0:
        ce = ce + lambda_ * jnp.max(K_tj) ** 2
    return ce


if __name__ == "__main__":
    key = jax.random.PRNGKey(0)
    B, C, D = 20, 16, 32          # batch, num_classes, feature dim of last linear layer

    k1, k2, k3 = jax.random.split(key, 3)
    prediction = jax.random.normal(k1, (B, C), dtype=jnp.float32)
    target = jax.random.randint(k2, (B,), 0, C, dtype=jnp.int32)
    # Deterministic synthetic "model.last_layer.weight" ([num_classes, features]).
    kW = jax.random.normal(k3, (C, D), dtype=jnp.float32) * 0.1

    base = dict(
        epsilon=36.0 / 255.0,
        err_quantile=0.01,        # PolynomialScheduler start_val (no .update() called)
        add_epsilon=36.0 / 255.0,
        L_val=1.0,                # self.L() : model Lipschitz constant (synthetic scalar)
    )

    # tile_b=8 forces a multi-tile grid (B=20 -> 3 tiles, last one partially masked),
    # exercising the pipelined batch grid, the row mask and the partial reduction.
    for onesided, lambda_ in ((True, 0.0), (False, 0.1)):
        hp = dict(base, onesided=onesided, lambda_=lambda_)
        loss = cll_forward(prediction, target, kW, tile_b=8, **hp)
        loss = jax.block_until_ready(loss)
        ref = _reference(prediction, target, kW, **hp)
        assert jnp.allclose(loss, ref, rtol=1e-4, atol=1e-4), (onesided, lambda_, loss, ref)

    print("KERNEL_OK")
</pallas_src>

<mosaic_0001>
module attributes {stable_mosaic.version = 11 : i64} {
  func.func @_cll_tile_kernel(%arg0: i32, %arg1: memref<8x16xf32, #tpu.memory_space<vmem>>, %arg2: memref<8x1xi32, #tpu.memory_space<vmem>>, %arg3: memref<16x16xf32, #tpu.memory_space<vmem>>, %arg4: memref<1x8x128xf32, #tpu.memory_space<vmem>>) attributes {dimension_semantics = [#tpu.dimension_semantics<parallel>], iteration_bounds = array<i64: 3>, scalar_prefetch = 0 : i64, scratch_operands = 0 : i64, tpu.core_type = #tpu.core_type<tc>, window_params = [{transform_indices = @transform_0, window_bounds = array<i64: 8, 16>}, {transform_indices = @transform_1, window_bounds = array<i64: 8, 1>}, {pipeline_mode = #tpu.pipeline_mode<synchronous>, transform_indices = @transform_2, window_bounds = array<i64: 16, 16>}, {transform_indices = @transform_3, window_bounds = array<i64: 1, 8, 128>}]} {
    %c0 = arith.constant 0 : index
    %c0_0 = arith.constant 0 : index
    %0 = vector.load %arg1[%c0, %c0_0] : memref<8x16xf32, #tpu.memory_space<vmem>>, vector<8x16xf32>
    %c0_1 = arith.constant 0 : index
    %c0_2 = arith.constant 0 : index
    %1 = vector.load %arg2[%c0_1, %c0_2] : memref<8x1xi32, #tpu.memory_space<vmem>>, vector<8x1xi32>
    %c0_3 = arith.constant 0 : index
    %c0_4 = arith.constant 0 : index
    %2 = vector.load %arg3[%c0_3, %c0_4] : memref<16x16xf32, #tpu.memory_space<vmem>>, vector<16x16xf32>
    %3 = tpu.iota {dimensions = array<i32: 1>} : vector<8x16xi32>
    %4 = vector.broadcast %1 : vector<8x1xi32> to vector<8x16xi32>
    %5 = arith.cmpi eq, %3, %4 : vector<8x16xi32>
    %6 = arith.extui %5 : vector<8x16xi1> to vector<8x16xi32>
    %7 = arith.sitofp %6 : vector<8x16xi32> to vector<8x16xf32>
    %cst = arith.constant dense<0.000000e+00> : vector<8x16xf32>
    %8 = tpu.matmul %7, %2, %cst {dimension_numbers = #tpu.dot_dimension_numbers<[1], [0], [0], [1], [0, 0, 1, 1], [], []>} : vector<8x16xf32>, vector<16x16xf32>, vector<8x16xf32> -> vector<8x16xf32>
    %9 = arith.mulf %7, %0 : vector<8x16xf32>
    %cst_5 = arith.constant dense<0.000000e+00> : vector<8xf32>
    %10 = vector.multi_reduction <add>, %9, %cst_5 [1] : vector<8x16xf32> to vector<8xf32>
    %11 = vector.shape_cast %10 : vector<8xf32> to vector<8x1xf32>
    %cst_6 = arith.constant 0.000000e+00 : f32
    %cst_7 = arith.constant 5.29330492 : f32
    %12 = vector.broadcast %cst_6 : f32 to vector<8x16xf32>
    %13 = vector.broadcast %cst_7 : f32 to vector<8x16xf32>
    %14 = arith.select %5, %12, %13 : vector<8x16xi1>, vector<8x16xf32>
    %15 = vector.broadcast %11 : vector<8x1xf32> to vector<8x16xf32>
    %16 = arith.subf %0, %15 : vector<8x16xf32>
    %17 = arith.mulf %16, %8 : vector<8x16xf32>
    %18 = arith.addf %17, %14 : vector<8x16xf32>
    %cst_8 = arith.constant dense<0xFF800000> : vector<8xf32>
    %19 = vector.multi_reduction <maximumf>, %18, %cst_8 [1] : vector<8x16xf32> to vector<8xf32>
    %20 = vector.shape_cast %19 : vector<8xf32> to vector<8x1xf32>
    %21 = vector.broadcast %20 : vector<8x1xf32> to vector<8x16xf32>
    %22 = arith.subf %18, %21 : vector<8x16xf32>
    %23 = math.exp %22 : vector<8x16xf32>
    %cst_9 = arith.constant dense<0.000000e+00> : vector<8xf32>
    %24 = vector.multi_reduction <add>, %23, %cst_9 [1] : vector<8x16xf32> to vector<8xf32>
    %25 = vector.shape_cast %24 : vector<8xf32> to vector<8x1xf32>
    %26 = math.log %25 : vector<8x1xf32>
    %27 = arith.addf %20, %26 : vector<8x1xf32>
    %cst_10 = arith.constant 0.000000e+00 : f32
    %28 = vector.broadcast %cst_10 : f32 to vector<8x1xf32>
    %29 = arith.subf %27, %28 : vector<8x1xf32>
    %30 = tpu.iota {dimensions = array<i32: 0>} : vector<8x1xi32>
    %c8_i32 = arith.constant 8 : i32
    %31 = arith.muli %arg0, %c8_i32 : i32
    %32 = vector.broadcast %31 : i32 to vector<8x1xi32>
    %33 = arith.addi %30, %32 : vector<8x1xi32>
    %c20_i32 = arith.constant 20 : i32
    %34 = vector.broadcast %c20_i32 : i32 to vector<8x1xi32>
    %35 = arith.cmpi slt, %33, %34 : vector<8x1xi32>
    %cst_11 = arith.constant 0.000000e+00 : f32
    %36 = vector.broadcast %cst_11 : f32 to vector<8x1xf32>
    %37 = arith.select %35, %29, %36 : vector<8x1xi1>, vector<8x1xf32>
    %38 = vector.shape_cast %37 : vector<8x1xf32> to vector<1x8x1xf32>
    %cst_12 = arith.constant dense<0.000000e+00> : vector<1xf32>
    %39 = vector.multi_reduction <add>, %38, %cst_12 [1, 2] : vector<1x8x1xf32> to vector<1xf32>
    %40 = vector.shape_cast %39 : vector<1xf32> to vector<1x1x1xf32>
    %41 = vector.extract %40[0, 0, 0] : f32 from vector<1x1x1xf32>
    %42 = vector.broadcast %41 : f32 to vector<1x8x128xf32>
    %c0_13 = arith.constant 0 : index
    %c0_14 = arith.constant 0 : index
    %c0_15 = arith.constant 0 : index
    %43 = vector.load %arg4[%c0_13, %c0_14, %c0_15] : memref<1x8x128xf32, #tpu.memory_space<vmem>>, vector<1x8x128xf32>
    tpu.vector_store %arg4[%c0_13, %c0_14, %c0_15], %42 {strides = array<i32>} : memref<1x8x128xf32, #tpu.memory_space<vmem>>, vector<1x8x128xf32>,
    return
  }
  func.func @transform_0(%arg0: i32) -> (i32, i32) {
    %c0_i32 = arith.constant 0 : i32
    %c0_i32_0 = arith.constant 0 : i32
    return %arg0, %c0_i32 : i32, i32
  }
  func.func @transform_1(%arg0: i32) -> (i32, i32) {
    %c0_i32 = arith.constant 0 : i32
    %c0_i32_0 = arith.constant 0 : i32
    return %arg0, %c0_i32 : i32, i32
  }
  func.func @transform_2(%arg0: i32) -> (i32, i32) {
    %c0_i32 = arith.constant 0 : i32
    %c0_i32_0 = arith.constant 0 : i32
    %c0_i32_1 = arith.constant 0 : i32
    return %c0_i32, %c0_i32_0 : i32, i32
  }
  func.func @transform_3(%arg0: i32) -> (i32, i32, i32) {
    %c0_i32 = arith.constant 0 : i32
    %c0_i32_0 = arith.constant 0 : i32
    %c0_i32_1 = arith.constant 0 : i32
    return %arg0, %c0_i32, %c0_i32_0 : i32, i32, i32
  }
}

module attributes {stable_mosaic.version = 11 : i64} {
  func.func @_cll_tile_kernel(%arg0: i32, %arg1: memref<8x16xf32, #tpu.memory_space<vmem>>, %arg2: memref<8x1xi32, #tpu.memory_space<vmem>>, %arg3: memref<16x16xf32, #tpu.memory_space<vmem>>, %arg4: memref<1x8x128xf32, #tpu.memory_space<vmem>>) attributes {dimension_semantics = [#tpu.dimension_semantics<parallel>], iteration_bounds = array<i64: 3>, scalar_prefetch = 0 : i64, scratch_operands = 0 : i64, tpu.core_type = #tpu.core_type<tc>, window_params = [{transform_indices = @transform_0, window_bounds = array<i64: 8, 16>}, {transform_indices = @transform_1, window_bounds = array<i64: 8, 1>}, {pipeline_mode = #tpu.pipeline_mode<synchronous>, transform_indices = @transform_2, window_bounds = array<i64: 16, 16>}, {transform_indices = @transform_3, window_bounds = array<i64: 1, 8, 128>}]} {
    %c0 = arith.constant 0 : index
    %c0_0 = arith.constant 0 : index
    %0 = vector.load %arg1[%c0, %c0_0] : memref<8x16xf32, #tpu.memory_space<vmem>>, vector<8x16xf32>
    %c0_1 = arith.constant 0 : index
    %c0_2 = arith.constant 0 : index
    %1 = vector.load %arg2[%c0_1, %c0_2] : memref<8x1xi32, #tpu.memory_space<vmem>>, vector<8x1xi32>
    %c0_3 = arith.constant 0 : index
    %c0_4 = arith.constant 0 : index
    %2 = vector.load %arg3[%c0_3, %c0_4] : memref<16x16xf32, #tpu.memory_space<vmem>>, vector<16x16xf32>
    %3 = tpu.iota {dimensions = array<i32: 1>} : vector<8x16xi32>
    %4 = vector.broadcast %1 : vector<8x1xi32> to vector<8x16xi32>
    %5 = arith.cmpi eq, %3, %4 : vector<8x16xi32>
    %6 = arith.extui %5 : vector<8x16xi1> to vector<8x16xi32>
    %7 = arith.sitofp %6 : vector<8x16xi32> to vector<8x16xf32>
    %cst = arith.constant dense<0.000000e+00> : vector<8x16xf32>
    %8 = tpu.matmul %7, %2, %cst {dimension_numbers = #tpu.dot_dimension_numbers<[1], [0], [0], [1], [0, 0, 1, 1], [], []>} : vector<8x16xf32>, vector<16x16xf32>, vector<8x16xf32> -> vector<8x16xf32>
    %9 = arith.mulf %7, %0 : vector<8x16xf32>
    %cst_5 = arith.constant dense<0.000000e+00> : vector<8xf32>
    %10 = vector.multi_reduction <add>, %9, %cst_5 [1] : vector<8x16xf32> to vector<8xf32>
    %11 = vector.shape_cast %10 : vector<8xf32> to vector<8x1xf32>
    %cst_6 = arith.constant 0.000000e+00 : f32
    %cst_7 = arith.constant 5.29330492 : f32
    %12 = vector.broadcast %cst_6 : f32 to vector<8x16xf32>
    %13 = vector.broadcast %cst_7 : f32 to vector<8x16xf32>
    %14 = arith.select %5, %12, %13 : vector<8x16xi1>, vector<8x16xf32>
    %15 = vector.broadcast %11 : vector<8x1xf32> to vector<8x16xf32>
    %16 = arith.subf %0, %15 : vector<8x16xf32>
    %17 = arith.mulf %16, %8 : vector<8x16xf32>
    %18 = arith.addf %17, %14 : vector<8x16xf32>
    %cst_8 = arith.constant dense<0xFF800000> : vector<8xf32>
    %19 = vector.multi_reduction <maximumf>, %18, %cst_8 [1] : vector<8x16xf32> to vector<8xf32>
    %20 = vector.shape_cast %19 : vector<8xf32> to vector<8x1xf32>
    %21 = vector.broadcast %20 : vector<8x1xf32> to vector<8x16xf32>
    %22 = arith.subf %18, %21 : vector<8x16xf32>
    %23 = math.exp %22 : vector<8x16xf32>
    %cst_9 = arith.constant dense<0.000000e+00> : vector<8xf32>
    %24 = vector.multi_reduction <add>, %23, %cst_9 [1] : vector<8x16xf32> to vector<8xf32>
    %25 = vector.shape_cast %24 : vector<8xf32> to vector<8x1xf32>
    %26 = math.log %25 : vector<8x1xf32>
    %27 = arith.addf %20, %26 : vector<8x1xf32>
    %cst_10 = arith.constant 0.000000e+00 : f32
    %28 = vector.broadcast %cst_10 : f32 to vector<8x1xf32>
    %29 = arith.subf %27, %28 : vector<8x1xf32>
    %30 = tpu.iota {dimensions = array<i32: 0>} : vector<8x1xi32>
    %c8_i32 = arith.constant 8 : i32
    %31 = arith.muli %arg0, %c8_i32 : i32
    %32 = vector.broadcast %31 : i32 to vector<8x1xi32>
    %33 = arith.addi %30, %32 : vector<8x1xi32>
    %c20_i32 = arith.constant 20 : i32
    %34 = vector.broadcast %c20_i32 : i32 to vector<8x1xi32>
    %35 = arith.cmpi slt, %33, %34 : vector<8x1xi32>
    %cst_11 = arith.constant 0.000000e+00 : f32
    %36 = vector.broadcast %cst_11 : f32 to vector<8x1xf32>
    %37 = arith.select %35, %29, %36 : vector<8x1xi1>, vector<8x1xf32>
    %38 = vector.shape_cast %37 : vector<8x1xf32> to vector<1x8x1xf32>
    %cst_12 = arith.constant dense<0.000000e+00> : vector<1xf32>
    %39 = vector.multi_reduction <add>, %38, %cst_12 [1, 2] : vector<1x8x1xf32> to vector<1xf32>
    %40 = vector.shape_cast %39 : vector<1xf32> to vector<1x1x1xf32>
    %41 = vector.extract %40[0, 0, 0] : f32 from vector<1x1x1xf32>
    %42 = vector.broadcast %41 : f32 to vector<1x8x128xf32>
    %c0_13 = arith.constant 0 : index
    %c0_14 = arith.constant 0 : index
    %c0_15 = arith.constant 0 : index
    %43 = vector.load %arg4[%c0_13, %c0_14, %c0_15] : memref<1x8x128xf32, #tpu.memory_space<vmem>>, vector<1x8x128xf32>
    tpu.vector_store %arg4[%c0_13, %c0_14, %c0_15], %42 {strides = array<i32>} : memref<1x8x128xf32, #tpu.memory_space<vmem>>, vector<1x8x128xf32>,
    return
  }
  func.func @transform_0(%arg0: i32) -> (i32, i32) {
    %c0_i32 = arith.constant 0 : i32
    %c0_i32_0 = arith.constant 0 : i32
    return %arg0, %c0_i32 : i32, i32
  }
  func.func @transform_1(%arg0: i32) -> (i32, i32) {
    %c0_i32 = arith.constant 0 : i32
    %c0_i32_0 = arith.constant 0 : i32
    return %arg0, %c0_i32 : i32, i32
  }
  func.func @transform_2(%arg0: i32) -> (i32, i32) {
    %c0_i32 = arith.constant 0 : i32
    %c0_i32_0 = arith.constant 0 : i32
    %c0_i32_1 = arith.constant 0 : i32
    return %c0_i32, %c0_i32_0 : i32, i32
  }
  func.func @transform_3(%arg0: i32) -> (i32, i32, i32) {
    %c0_i32 = arith.constant 0 : i32
    %c0_i32_0 = arith.constant 0 : i32
    %c0_i32_1 = arith.constant 0 : i32
    return %arg0, %c0_i32, %c0_i32_0 : i32, i32, i32
  }
}

</mosaic_0001>

<llo_original>
// kernel: tpu_custom_call.1
$region0: #{tpu_custom_call.1}
  #allocation0 [shape = 'u32[]', space=smem, size = 0x4, offset = 0x4, fixed_abs, tag = 'smem constant byte address 0x4 - core index']
  #allocation1 [shape = 'u32[144,128]{1,0:T(1,128)}', space=vmem, size = 0x12000, scoped, tag = 'internal scratch']
  %s0 = inlined_call_operand.vmem [shape: f32[24,16], index: 0, kind: input, shape index: {}]
  %s1 = inlined_call_operand.vmem [shape: s32[24,1], index: 1, kind: input, shape index: {}]
  %s2 = inlined_call_operand.vmem [shape: f32[16,16], index: 2, kind: input, shape index: {}]
  %s3 = inlined_call_operand.hbm [shape: f32[3,8,128], index: 3, kind: output, shape index: {}]
  %s4 = sld [smem:[#allocation0]]
  $region45: #{tpu_custom_call.1} parent=0
    _
  %s6 = ssub.s32 1, %s4
  %s7 = scalar_select 0, %s6, %s4
  $region1: #{tpu_custom_call.1} parent=0
    #allocation2 [shape = 'u8[8192]{0}', space=vmem, size = 0x2000, scoped, tag = 'output window, operand 0']
    #allocation3 [shape = 's32[2]{0}', space=sflag, size = 0x8, scoped, tag = 'scoped memory for tpu_custom_call.1']
    %8 = vsyncpa [#allocation3], 0
    %s9 = scalar_lea.sflag [#allocation3], 1
    %10 = vsyncpa %s9, 0
    loop: start=0, step=1, limit=5
    $region2: #{tpu_custom_call.1} parent=1 // loop_pre_header
      _
    $region3: #{tpu_custom_call.1} parent=1 // loop_header
      %s12 = sphi 0, %s16
      %p13 = scmp.ge.s32.totalorder %s12, 5
      %s22 = sphi 0, %s24
      %s25 = sphi 0, %s22
      %s26 = sphi 0, %s25
      %s42 = sphi 0, %s26
      %s48 = sphi 0, %s50
      %s51 = sphi 0, %s48
      %s52 = sphi 0, %s51
      %s68 = sphi 0, %s52
      %s72 = sphi 0, %s72
      %s74 = sphi 0, %s72
      %s75 = sphi 0, %s74
      %s89 = sphi 0, %s75
      %s95 = sphi 0, %s97
      %s98 = sphi 0, %s95
      %s99 = sphi 0, %s98
      %s115 = sphi 0, %s99
    $region4: #{tpu_custom_call.1} parent=1 // loop_header_branch
      %15 = sbr.rel (%p13) target = $region8
    $region5: #{tpu_custom_call.1} parent=1 // loop_body
      %s17 = ssub.s32 %s12, 1
      %s18 = ssub.s32 %s12, 2
      %s19 = sadd.s32 %s12, 1
      %s20 = ssub.s32 %s12, %s19
      %p21 = scmp.eq.s32.totalorder %s20, 0
      %s23 = sadd.s32 %s22, 1
      %s24 = scalar_select %p21, %s22, %s23
      %p27 = pneg %p21
      %p28 = scmp.eq.s32.totalorder %s12, 2
      %p29 = por %p27, %p28
      %p30 = scmp.ne.s32.totalorder %s22, %s25
      %p31 = scmp.eq.s32.totalorder %s12, 0
      %p32 = por %p30, %p31
      %p33 = scmp.ne.s32.totalorder %s22, %s25
      %p34 = scmp.eq.s32.totalorder %s17, 2
      %p35 = por %p33, %p34
      %p36 = scmp.ne.s32.totalorder %s25, %s26
      %p37 = scmp.eq.s32.totalorder %s17, 0
      %p38 = por %p36, %p37
      %p39 = scmp.ne.s32.totalorder %s25, %s26
      %p40 = scmp.eq.s32.totalorder %s18, 2
      %p41 = por %p39, %p40
      %p43 = scmp.ne.s32.totalorder %s26, %s42
      %p44 = scmp.eq.s32.totalorder %s18, 0
      %p45 = por %p43, %p44
      %s46 = ssub.s32 %s12, %s19
      %p47 = scmp.eq.s32.totalorder %s46, 0
      %s49 = sadd.s32 %s48, 1
      %s50 = scalar_select %p47, %s48, %s49
      %p53 = pneg %p47
      %p54 = scmp.eq.s32.totalorder %s12, 2
      %p55 = por %p53, %p54
      %p56 = scmp.ne.s32.totalorder %s48, %s51
      %p57 = scmp.eq.s32.totalorder %s12, 0
      %p58 = por %p56, %p57
      %p59 = scmp.ne.s32.totalorder %s48, %s51
      %p60 = scmp.eq.s32.totalorder %s17, 2
      %p61 = por %p59, %p60
      %p62 = scmp.ne.s32.totalorder %s51, %s52
      %p63 = scmp.eq.s32.totalorder %s17, 0
      %p64 = por %p62, %p63
      %p65 = scmp.ne.s32.totalorder %s51, %s52
      %p66 = scmp.eq.s32.totalorder %s18, 2
      %p67 = por %p65, %p66
      %p69 = scmp.ne.s32.totalorder %s52, %s68
      %p70 = scmp.eq.s32.totalorder %s18, 0
      %p71 = por %p69, %p70
      %s73 = sadd.s32 %s72, 1
      %p76 = scmp.eq.s32.totalorder %s12, 2
      %p77 = scmp.ne.s32.totalorder %s72, %s74
      %p78 = scmp.eq.s32.totalorder %s12, 0
      %p79 = por %p77, %p78
      %p80 = scmp.ne.s32.totalorder %s72, %s74
      %p81 = scmp.eq.s32.totalorder %s17, 2
      %p82 = por %p80, %p81
      %p83 = scmp.ne.s32.totalorder %s74, %s75
      %p84 = scmp.eq.s32.totalorder %s17, 0
      %p85 = por %p83, %p84
      %p86 = scmp.ne.s32.totalorder %s74, %s75
      %p87 = scmp.eq.s32.totalorder %s18, 2
      %p88 = por %p86, %p87
      %p90 = scmp.ne.s32.totalorder %s75, %s89
      %p91 = scmp.eq.s32.totalorder %s18, 0
      %p92 = por %p90, %p91
      %s93 = ssub.s32 %s12, %s19
      %p94 = scmp.eq.s32.totalorder %s93, 0
      %s96 = sadd.s32 %s95, 1
      %s97 = scalar_select %p94, %s95, %s96
      %p100 = pneg %p94
      %p101 = scmp.eq.s32.totalorder %s12, 2
      %p102 = por %p100, %p101
      %p103 = scmp.ne.s32.totalorder %s95, %s98
      %p104 = scmp.eq.s32.totalorder %s12, 0
      %p105 = por %p103, %p104
      %p106 = scmp.ne.s32.totalorder %s95, %s98
      %p107 = scmp.eq.s32.totalorder %s17, 2
      %p108 = por %p106, %p107
      %p109 = scmp.ne.s32.totalorder %s98, %s99
      %p110 = scmp.eq.s32.totalorder %s17, 0
      %p111 = por %p109, %p110
      %p112 = scmp.ne.s32.totalorder %s98, %s99
      %p113 = scmp.eq.s32.totalorder %s18, 2
      %p114 = por %p112, %p113
      %p116 = scmp.ne.s32.totalorder %s99, %s115
      %p117 = scmp.eq.s32.totalorder %s18, 0
      %p118 = por %p116, %p117
      %p119 = scmp.le.s32.totalorder 1, %s12
      %p120 = scmp.lt.s32.totalorder %s12, 4
      %p121 = pnand %p119, %p120
      %p122 = pneg %p121
      // Predicated region
      $region9: #{tpu_custom_call.1} parent=5 // pred_check
        _
      $region10: #{tpu_custom_call.1} parent=5 // pred_check_branch
        %124 = sbr.rel (%p121) target = $region12
      $region11: #{tpu_custom_call.1} parent=5 // pred_region
        %s125 = ssub.s32 %s12, 1
        // Predicated region
        $region13: #{tpu_custom_call.1} parent=11 // pred_check
          %p126 = pneg %p85
        $region14: #{tpu_custom_call.1} parent=11 // pred_check_branch
          %128 = sbr.rel (%p126) target = $region16
        $region15: #{tpu_custom_call.1} parent=11 // pred_region
          _
        $region16: #{tpu_custom_call.1} parent=11 // pred_fallthru
          _
      $region12: #{tpu_custom_call.1} parent=5 // pred_fallthru
        _
      %p129 = scmp.lt.s32.totalorder %s12, 3
      // Predicated region
      $region17: #{tpu_custom_call.1} parent=5 // pred_check
        %p130 = pneg %p129
      $region18: #{tpu_custom_call.1} parent=5 // pred_check_branch
        %132 = sbr.rel (%p130) target = $region20
      $region19: #{tpu_custom_call.1} parent=5 // pred_region
        // Predicated region
        $region21: #{tpu_custom_call.1} parent=19 // pred_check
          %p133 = pneg %p32
        $region22: #{tpu_custom_call.1} parent=19 // pred_check_branch
          %135 = sbr.rel (%p133) target = $region24
        $region23: #{tpu_custom_call.1} parent=19 // pred_region
          %p136 = scmp.lt.s32.totalorder %s12, 2
          %s137 = scalar_select %p136, %s12, 2
          %s138 = smul.addr %s137, 8
          %s139 = scalar_lea.vmem %s0, %s138
        $region24: #{tpu_custom_call.1} parent=19 // pred_fallthru
          _
        // Predicated region
        $region25: #{tpu_custom_call.1} parent=19 // pred_check
          %p140 = pneg %p58
        $region26: #{tpu_custom_call.1} parent=19 // pred_check_branch
          %142 = sbr.rel (%p140) target = $region28
        $region27: #{tpu_custom_call.1} parent=19 // pred_region
          %p143 = scmp.lt.s32.totalorder %s12, 2
          %s144 = scalar_select %p143, %s12, 2
          %s145 = smul.addr %s144, 8
          %s146 = scalar_lea.vmem %s1, %s145
        $region28: #{tpu_custom_call.1} parent=19 // pred_fallthru
          _
      $region20: #{tpu_custom_call.1} parent=5 // pred_fallthru
        _
      %p147 = scmp.le.s32.totalorder 1, %s12
      %p148 = scmp.lt.s32.totalorder %s12, 4
      %p149 = pnand %p147, %p148
      %p150 = pneg %p149
      // Predicated region
      $region29: #{tpu_custom_call.1} parent=5 // pred_check
        _
      $region30: #{tpu_custom_call.1} parent=5 // pred_check_branch
        %152 = sbr.rel (%p149) target = $region32
      $region31: #{tpu_custom_call.1} parent=5 // pred_region
        %s153 = ssub.s32 %s12, 1
        %p154 = scmp.lt.s32.totalorder %s17, 2
        %s155 = scalar_select %p154, %s17, 2
        %s156 = smul.addr %s155, 8
        %s157 = scalar_lea.vmem %s0, %s156
        %p158 = pneg %p38
        %p159 = pneg %p35
        %p160 = scmp.lt.s32.totalorder %s17, 2
        %s161 = scalar_select %p160, %s17, 2
        %s162 = smul.addr %s161, 8
        %s163 = scalar_lea.vmem %s1, %s162
        %p164 = pneg %p64
        %p165 = pneg %p61
        %p166 = pneg %p85
        %p167 = pneg %p82
        %p168 = pneg %p111
        %p169 = pneg %p108
        %s170 = sand.u32 %s98, 1
        %s171 = scalar_lea.sflag [#allocation3], %s170
        %s172 = sand.u32 %s98, 1
        %s173 = smul.addr %s172, 8
        %s174 = scalar_lea.vmem [#allocation2], %s173
        %p175 = scmp.lt.s32.totalorder %s17, 2
        %s176 = scalar_select %p175, %s17, 2
        %s177 = smul.addr %s176, 8
        %s178 = scalar_lea.vmem %s0, %s177
        %p179 = scmp.lt.s32.totalorder %s17, 2
        %s180 = scalar_select %p179, %s17, 2
        %s181 = smul.addr %s180, 8
        %s182 = scalar_lea.vmem %s1, %s181
        %v183 = vld [vmem:[%s178] sm:$0xff]
        %v184 = vld [vmem:[%s182] sm:$0xff]
        %v185 = vld [vmem:[%s2] sm:$0xff]
        %v186 = vld [vmem:[%s2 + $0x8] sm:$0xff]
        %v187 = vlaneseq
        %v188 = vand.u32 %v187, 127
        %189 = vset.pattern.permute.xlu0 0
        %190 = vperm.xlu0 %189, %v184
        %v191 = vpop.permute.xlu0 %190
        %vm192 = vcmp.eq.s32.totalorder %v188, %v191
        %v193 = vsel %vm192, 1, 0
        %v194 = vcvt.s32.f32 %v193
        %vm195 = vcmask 130048
        %v197 = vsel %vm195, %v194, 0
        %199 = vmatprep.subr.mxu0 0.0
        %200 = vmatpush1.msra.mxu0 0.0
        %201 = vmatprep.subr.mxu0 0.0
        %202 = vmatpush1.msra.mxu0 0.0
        %203 = vmatprep.subr.mxu0 0.0
        %204 = vmatpush1.msra.mxu0 0.0
        %205 = vmatprep.subr.mxu0 0.0
        %206 = vmatpush1.msra.mxu0 0.0
        %207 = vmatprep.subr.mxu0 0.0
        %208 = vmatpush1.msra.mxu0 0.0
        %209 = vmatprep.subr.mxu0 0.0
        %210 = vmatpush1.msra.mxu0 0.0
        %211 = vmatprep.subr.mxu0 0.0
        %212 = vmatpush1.msra.mxu0 0.0
        %213 = vmatprep.subr.mxu0 0.0
        %214 = vmatpush1.msra.mxu0 0.0
        %215 = vmatprep.subr.mxu0 0.0
        %216 = vmatpush1.msra.mxu0 0.0
        %217 = vmatprep.subr.mxu0 0.0
        %218 = vmatpush1.msra.mxu0 0.0
        %219 = vmatprep.subr.mxu0 0.0
        %220 = vmatpush1.msra.mxu0 0.0
        %221 = vmatprep.subr.mxu0 0.0
        %222 = vmatpush1.msra.mxu0 0.0
        %223 = vmatprep.subr.mxu0 0.0
        %224 = vmatpush1.msra.mxu0 0.0
        %225 = vmatprep.subr.mxu0 0.0
        %226 = vmatpush1.msra.mxu0 0.0
        %227 = vmatprep.subr.mxu0 0.0
        %228 = vmatpush1.msra.mxu0 %v186
        %229 = vmatprep.subr.mxu0 0.0
        %230 = vmatpush1.msra.mxu0 %v185
        %231 = vmatprep.subr.mxu0 0.0
        %232 = vmatpush2.msra.mxu0 0.0
        %233 = vmatprep.subr.mxu0 0.0
        %234 = vmatpush2.msra.mxu0 0.0
        %235 = vmatprep.subr.mxu0 0.0
        %236 = vmatpush2.msra.mxu0 0.0
        %237 = vmatprep.subr.mxu0 0.0
        %238 = vmatpush2.msra.mxu0 0.0
        %239 = vmatprep.subr.mxu0 0.0
        %240 = vmatpush2.msra.mxu0 0.0
        %241 = vmatprep.subr.mxu0 0.0
        %242 = vmatpush2.msra.mxu0 0.0
        %243 = vmatprep.subr.mxu0 0.0
        %244 = vmatpush2.msra.mxu0 0.0
        %245 = vmatprep.subr.mxu0 0.0
        %246 = vmatpush2.msra.mxu0 0.0
        %247 = vmatprep.subr.mxu0 0.0
        %248 = vmatpush2.msra.mxu0 0.0
        %249 = vmatprep.subr.mxu0 0.0
        %250 = vmatpush2.msra.mxu0 0.0
        %251 = vmatprep.subr.mxu0 0.0
        %252 = vmatpush2.msra.mxu0 0.0
        %253 = vmatprep.subr.mxu0 0.0
        %254 = vmatpush2.msra.mxu0 0.0
        %255 = vmatprep.subr.mxu0 0.0
        %256 = vmatpush2.msra.mxu0 0.0
        %257 = vmatprep.subr.mxu0 0.0
        %258 = vmatpush2.msra.mxu0 0.0
        %259 = vmatprep.subr.mxu0 0.0
        %260 = vmatpush2.msra.mxu0 0.0
        %261 = vmatprep.subr.mxu0 0.0
        %262 = vmatpush2.msra.mxu0 0.0
        %263 = vmatprep.mubr.f32.mxu0 0.0
        %264 = vmatmul.mubr.f32.gmra.mxu0 %v197
        %v265 = vpop.f32.mrf.mxu0
        %v266 = vadd.f32 0.0, %v265
        %v267 = vpop.f32.mrf.mxu0
        %268 = vdwg.mxu0
        %v269 = vmul.f32 %v194, %v183
        %v270 = vsel %vm195, %v269, 0.0
        %271 = vadd.xlane.f32.xlu0 %v270
        %v272 = vpop.xlane.xlu0 %271
        %v273 = vsel %vm192, 0.0, 5.293305
        %v274 = vsub.f32 %v183, %v272
        %v275 = vmul.f32 %v274, %v266
        %v276 = vadd.f32 %v275, %v273
        %v277 = vsel %vm195, %v276, -inf
        %278 = vmax.xlane.f32.xlu0 %v277
        %v279 = vpop.xlane.xlu0 %278
        %v280 = vsub.f32 %v276, %v279
        %v281 = vmul.f32 %v280, 1.442695
        %v282 = vpow.pop %v281
        %v283 = vsel %vm195, %v282, 0.0
        %284 = vadd.xlane.f32.xlu0 %v283
        %v285 = vpop.xlane.xlu0 %284
        %v286 = vlog2.pop %v285
        %v287 = vmul.f32 %v286, 0.6931472
        %v288 = vadd.f32 %v279, %v287
        %v289 = vlaneseq
        %v290 = vshrl.u32 %v289, 7
        %s291 = smul.u32 %s17, 8
        %v292 = vstv %s291
        %v293 = vadd.s32 %v290, %v292
        %vm294 = vcmp.lt.s32.totalorder %v293, 20
        %v295 = vsel %vm294, %v288, 0.0
        %vm296 = vcmask 7168
        %v297 = vsel %vm296, %v295, 0.0
        %298 = vadd.xlane.f32.xlu0 %v297
        %v299 = vpop.xlane.xlu0 %298
        %v300 = vrot.slane %v299, 4
        %v301 = vadd.f32 %v299, %v300
        %v302 = vrot.slane %v301, 2
        %v303 = vadd.f32 %v301, %v302
        %v304 = vrot.slane %v303, 1
        %v305 = vadd.f32 %v303, %v304
        %s306 = vtos %v305
        %v307 = vstv %s306
        %308 = vst [vmem:[%s174] sm:$0xff] %v307
        %s309 = sand.u32 %s98, 1
        %s310 = scalar_lea.sflag [#allocation3], %s309
        %s311 = sand.u32 %s98, 1
        %s312 = smul.addr %s311, 8
        %s313 = scalar_lea.vmem [#allocation2], %s312
        // Predicated region
        $region33: #{tpu_custom_call.1} parent=31 // pred_check
          %p314 = pneg %p108
        $region34: #{tpu_custom_call.1} parent=31 // pred_check_branch
          %316 = sbr.rel (%p314) target = $region36
        $region35: #{tpu_custom_call.1} parent=31 // pred_region
          %s318 = ssub.s32 128, 128
          %319 = vsyncadd %s310, %s318
          %s320 = smul.addr %s17, 128
          %s321 = scalar_lea.hbm %s3, %s320
          %s323 = sshll.u32 %s313, 4
          %s324 = int_to_ptr.vmem [resolvable:$true] %s323
          %326 = dma.vmem_to_hbm [thread:$0]  %s324, 128, %s321, %s310
        $region36: #{tpu_custom_call.1} parent=31 // pred_fallthru
          _
      $region32: #{tpu_custom_call.1} parent=5 // pred_fallthru
        _
      %p327 = scmp.le.s32.totalorder 2, %s12
      // Predicated region
      $region37: #{tpu_custom_call.1} parent=5 // pred_check
        %p328 = pneg %p327
      $region38: #{tpu_custom_call.1} parent=5 // pred_check_branch
        %330 = sbr.rel (%p328) target = $region40
      $region39: #{tpu_custom_call.1} parent=5 // pred_region
        %s331 = ssub.s32 %s12, 2
        // Predicated region
        $region41: #{tpu_custom_call.1} parent=39 // pred_check
          %p332 = pneg %p114
        $region42: #{tpu_custom_call.1} parent=39 // pred_check_branch
          %334 = sbr.rel (%p332) target = $region44
        $region43: #{tpu_custom_call.1} parent=39 // pred_region
          %s335 = sand.u32 %s99, 1
          %s336 = scalar_lea.sflag [#allocation3], %s335
          %s337 = sand.u32 %s99, 1
          %s338 = smul.addr %s337, 8
          %s339 = scalar_lea.vmem [#allocation2], %s338
          %340 = dma.done %s336, 128
        $region44: #{tpu_custom_call.1} parent=39 // pred_fallthru
          _
      $region40: #{tpu_custom_call.1} parent=5 // pred_fallthru
        _
    $region6: #{tpu_custom_call.1} parent=1 // loop_footer
      %s16 = sadd.s32 1, %s12
    $region7: #{tpu_custom_call.1} parent=1 // loop_footer_branch
      %11 = sbr.rel target = $region3
    $region8: #{tpu_custom_call.1} parent=1 // loop_exit
      _
    %341 = vsyncpa [#allocation3], 1
    %s342 = scalar_lea.sflag [#allocation3], 1
    %343 = vsyncpa %s342, 1

// kernel: tpu_custom_call.1
$region0: #{tpu_custom_call.1}
  #allocation0 [shape = 'u32[]', space=smem, size = 0x4, offset = 0x4, fixed_abs, tag = 'smem constant byte address 0x4 - core index']
  #allocation1 [shape = 'u32[144,128]{1,0:T(1,128)}', space=vmem, size = 0x12000, scoped, tag = 'internal scratch']
  %s0 = inlined_call_operand.vmem [shape: f32[24,16], index: 0, kind: input, shape index: {}]
  %s1 = inlined_call_operand.vmem [shape: s32[24,1], index: 1, kind: input, shape index: {}]
  %s2 = inlined_call_operand.vmem [shape: f32[16,16], index: 2, kind: input, shape index: {}]
  %s3 = inlined_call_operand.hbm [shape: f32[3,8,128], index: 3, kind: output, shape index: {}]
  %s4 = sld [smem:[#allocation0]]
  $region45: #{tpu_custom_call.1} parent=0
    _
  %s6 = ssub.s32 1, %s4
  %s7 = scalar_select 0, %s6, %s4
  $region1: #{tpu_custom_call.1} parent=0
    #allocation2 [shape = 'u8[8192]{0}', space=vmem, size = 0x2000, scoped, tag = 'output window, operand 0']
    #allocation3 [shape = 's32[2]{0}', space=sflag, size = 0x8, scoped, tag = 'scoped memory for tpu_custom_call.1']
    %8 = vsyncpa [#allocation3], 0
    %s9 = scalar_lea.sflag [#allocation3], 1
    %10 = vsyncpa %s9, 0
    loop: start=0, step=1, limit=5
    $region2: #{tpu_custom_call.1} parent=1 // loop_pre_header
      _
    $region3: #{tpu_custom_call.1} parent=1 // loop_header
      %s12 = sphi 0, %s16
      %p13 = scmp.ge.s32.totalorder %s12, 5
      %s22 = sphi 0, %s24
      %s25 = sphi 0, %s22
      %s26 = sphi 0, %s25
      %s42 = sphi 0, %s26
      %s48 = sphi 0, %s50
      %s51 = sphi 0, %s48
      %s52 = sphi 0, %s51
      %s68 = sphi 0, %s52
      %s72 = sphi 0, %s72
      %s74 = sphi 0, %s72
      %s75 = sphi 0, %s74
      %s89 = sphi 0, %s75
      %s95 = sphi 0, %s97
      %s98 = sphi 0, %s95
      %s99 = sphi 0, %s98
      %s115 = sphi 0, %s99
    $region4: #{tpu_custom_call.1} parent=1 // loop_header_branch
      %15 = sbr.rel (%p13) target = $region8
    $region5: #{tpu_custom_call.1} parent=1 // loop_body
      %s17 = ssub.s32 %s12, 1
      %s18 = ssub.s32 %s12, 2
      %s19 = sadd.s32 %s12, 1
      %s20 = ssub.s32 %s12, %s19
      %p21 = scmp.eq.s32.totalorder %s20, 0
      %s23 = sadd.s32 %s22, 1
      %s24 = scalar_select %p21, %s22, %s23
      %p27 = pneg %p21
      %p28 = scmp.eq.s32.totalorder %s12, 2
      %p29 = por %p27, %p28
      %p30 = scmp.ne.s32.totalorder %s22, %s25
      %p31 = scmp.eq.s32.totalorder %s12, 0
      %p32 = por %p30, %p31
      %p33 = scmp.ne.s32.totalorder %s22, %s25
      %p34 = scmp.eq.s32.totalorder %s17, 2
      %p35 = por %p33, %p34
      %p36 = scmp.ne.s32.totalorder %s25, %s26
      %p37 = scmp.eq.s32.totalorder %s17, 0
      %p38 = por %p36, %p37
      %p39 = scmp.ne.s32.totalorder %s25, %s26
      %p40 = scmp.eq.s32.totalorder %s18, 2
      %p41 = por %p39, %p40
      %p43 = scmp.ne.s32.totalorder %s26, %s42
      %p44 = scmp.eq.s32.totalorder %s18, 0
      %p45 = por %p43, %p44
      %s46 = ssub.s32 %s12, %s19
      %p47 = scmp.eq.s32.totalorder %s46, 0
      %s49 = sadd.s32 %s48, 1
      %s50 = scalar_select %p47, %s48, %s49
      %p53 = pneg %p47
      %p54 = scmp.eq.s32.totalorder %s12, 2
      %p55 = por %p53, %p54
      %p56 = scmp.ne.s32.totalorder %s48, %s51
      %p57 = scmp.eq.s32.totalorder %s12, 0
      %p58 = por %p56, %p57
      %p59 = scmp.ne.s32.totalorder %s48, %s51
      %p60 = scmp.eq.s32.totalorder %s17, 2
      %p61 = por %p59, %p60
      %p62 = scmp.ne.s32.totalorder %s51, %s52
      %p63 = scmp.eq.s32.totalorder %s17, 0
      %p64 = por %p62, %p63
      %p65 = scmp.ne.s32.totalorder %s51, %s52
      %p66 = scmp.eq.s32.totalorder %s18, 2
      %p67 = por %p65, %p66
      %p69 = scmp.ne.s32.totalorder %s52, %s68
      %p70 = scmp.eq.s32.totalorder %s18, 0
      %p71 = por %p69, %p70
      %s73 = sadd.s32 %s72, 1
      %p76 = scmp.eq.s32.totalorder %s12, 2
      %p77 = scmp.ne.s32.totalorder %s72, %s74
      %p78 = scmp.eq.s32.totalorder %s12, 0
      %p79 = por %p77, %p78
      %p80 = scmp.ne.s32.totalorder %s72, %s74
      %p81 = scmp.eq.s32.totalorder %s17, 2
      %p82 = por %p80, %p81
      %p83 = scmp.ne.s32.totalorder %s74, %s75
      %p84 = scmp.eq.s32.totalorder %s17, 0
      %p85 = por %p83, %p84
      %p86 = scmp.ne.s32.totalorder %s74, %s75
      %p87 = scmp.eq.s32.totalorder %s18, 2
      %p88 = por %p86, %p87
      %p90 = scmp.ne.s32.totalorder %s75, %s89
      %p91 = scmp.eq.s32.totalorder %s18, 0
      %p92 = por %p90, %p91
      %s93 = ssub.s32 %s12, %s19
      %p94 = scmp.eq.s32.totalorder %s93, 0
      %s96 = sadd.s32 %s95, 1
      %s97 = scalar_select %p94, %s95, %s96
      %p100 = pneg %p94
      %p101 = scmp.eq.s32.totalorder %s12, 2
      %p102 = por %p100, %p101
      %p103 = scmp.ne.s32.totalorder %s95, %s98
      %p104 = scmp.eq.s32.totalorder %s12, 0
      %p105 = por %p103, %p104
      %p106 = scmp.ne.s32.totalorder %s95, %s98
      %p107 = scmp.eq.s32.totalorder %s17, 2
      %p108 = por %p106, %p107
      %p109 = scmp.ne.s32.totalorder %s98, %s99
      %p110 = scmp.eq.s32.totalorder %s17, 0
      %p111 = por %p109, %p110
      %p112 = scmp.ne.s32.totalorder %s98, %s99
      %p113 = scmp.eq.s32.totalorder %s18, 2
      %p114 = por %p112, %p113
      %p116 = scmp.ne.s32.totalorder %s99, %s115
      %p117 = scmp.eq.s32.totalorder %s18, 0
      %p118 = por %p116, %p117
      %p119 = scmp.le.s32.totalorder 1, %s12
      %p120 = scmp.lt.s32.totalorder %s12, 4
      %p121 = pnand %p119, %p120
      %p122 = pneg %p121
      // Predicated region
      $region9: #{tpu_custom_call.1} parent=5 // pred_check
        _
      $region10: #{tpu_custom_call.1} parent=5 // pred_check_branch
        %124 = sbr.rel (%p121) target = $region12
      $region11: #{tpu_custom_call.1} parent=5 // pred_region
        %s125 = ssub.s32 %s12, 1
        // Predicated region
        $region13: #{tpu_custom_call.1} parent=11 // pred_check
          %p126 = pneg %p85
        $region14: #{tpu_custom_call.1} parent=11 // pred_check_branch
          %128 = sbr.rel (%p126) target = $region16
        $region15: #{tpu_custom_call.1} parent=11 // pred_region
          _
        $region16: #{tpu_custom_call.1} parent=11 // pred_fallthru
          _
      $region12: #{tpu_custom_call.1} parent=5 // pred_fallthru
        _
      %p129 = scmp.lt.s32.totalorder %s12, 3
      // Predicated region
      $region17: #{tpu_custom_call.1} parent=5 // pred_check
        %p130 = pneg %p129
      $region18: #{tpu_custom_call.1} parent=5 // pred_check_branch
        %132 = sbr.rel (%p130) target = $region20
      $region19: #{tpu_custom_call.1} parent=5 // pred_region
        // Predicated region
        $region21: #{tpu_custom_call.1} parent=19 // pred_check
          %p133 = pneg %p32
        $region22: #{tpu_custom_call.1} parent=19 // pred_check_branch
          %135 = sbr.rel (%p133) target = $region24
        $region23: #{tpu_custom_call.1} parent=19 // pred_region
          %p136 = scmp.lt.s32.totalorder %s12, 2
          %s137 = scalar_select %p136, %s12, 2
          %s138 = smul.addr %s137, 8
          %s139 = scalar_lea.vmem %s0, %s138
        $region24: #{tpu_custom_call.1} parent=19 // pred_fallthru
          _
        // Predicated region
        $region25: #{tpu_custom_call.1} parent=19 // pred_check
          %p140 = pneg %p58
        $region26: #{tpu_custom_call.1} parent=19 // pred_check_branch
          %142 = sbr.rel (%p140) target = $region28
        $region27: #{tpu_custom_call.1} parent=19 // pred_region
          %p143 = scmp.lt.s32.totalorder %s12, 2
          %s144 = scalar_select %p143, %s12, 2
          %s145 = smul.addr %s144, 8
          %s146 = scalar_lea.vmem %s1, %s145
        $region28: #{tpu_custom_call.1} parent=19 // pred_fallthru
          _
      $region20: #{tpu_custom_call.1} parent=5 // pred_fallthru
        _
      %p147 = scmp.le.s32.totalorder 1, %s12
      %p148 = scmp.lt.s32.totalorder %s12, 4
      %p149 = pnand %p147, %p148
      %p150 = pneg %p149
      // Predicated region
      $region29: #{tpu_custom_call.1} parent=5 // pred_check
        _
      $region30: #{tpu_custom_call.1} parent=5 // pred_check_branch
        %152 = sbr.rel (%p149) target = $region32
      $region31: #{tpu_custom_call.1} parent=5 // pred_region
        %s153 = ssub.s32 %s12, 1
        %p154 = scmp.lt.s32.totalorder %s17, 2
        %s155 = scalar_select %p154, %s17, 2
        %s156 = smul.addr %s155, 8
        %s157 = scalar_lea.vmem %s0, %s156
        %p158 = pneg %p38
        %p159 = pneg %p35
        %p160 = scmp.lt.s32.totalorder %s17, 2
        %s161 = scalar_select %p160, %s17, 2
        %s162 = smul.addr %s161, 8
        %s163 = scalar_lea.vmem %s1, %s162
        %p164 = pneg %p64
        %p165 = pneg %p61
        %p166 = pneg %p85
        %p167 = pneg %p82
        %p168 = pneg %p111
        %p169 = pneg %p108
        %s170 = sand.u32 %s98, 1
        %s171 = scalar_lea.sflag [#allocation3], %s170
        %s172 = sand.u32 %s98, 1
        %s173 = smul.addr %s172, 8
        %s174 = scalar_lea.vmem [#allocation2], %s173
        %p175 = scmp.lt.s32.totalorder %s17, 2
        %s176 = scalar_select %p175, %s17, 2
        %s177 = smul.addr %s176, 8
        %s178 = scalar_lea.vmem %s0, %s177
        %p179 = scmp.lt.s32.totalorder %s17, 2
        %s180 = scalar_select %p179, %s17, 2
        %s181 = smul.addr %s180, 8
        %s182 = scalar_lea.vmem %s1, %s181
        %v183 = vld [vmem:[%s178] sm:$0xff]
        %v184 = vld [vmem:[%s182] sm:$0xff]
        %v185 = vld [vmem:[%s2] sm:$0xff]
        %v186 = vld [vmem:[%s2 + $0x8] sm:$0xff]
        %v187 = vlaneseq
        %v188 = vand.u32 %v187, 127
        %189 = vset.pattern.permute.xlu0 0
        %190 = vperm.xlu0 %189, %v184
        %v191 = vpop.permute.xlu0 %190
        %vm192 = vcmp.eq.s32.totalorder %v188, %v191
        %v193 = vsel %vm192, 1, 0
        %v194 = vcvt.s32.f32 %v193
        %vm195 = vcmask 130048
        %v197 = vsel %vm195, %v194, 0
        %199 = vmatprep.subr.mxu0 0.0
        %200 = vmatpush1.msra.mxu0 0.0
        %201 = vmatprep.subr.mxu0 0.0
        %202 = vmatpush1.msra.mxu0 0.0
        %203 = vmatprep.subr.mxu0 0.0
        %204 = vmatpush1.msra.mxu0 0.0
        %205 = vmatprep.subr.mxu0 0.0
        %206 = vmatpush1.msra.mxu0 0.0
        %207 = vmatprep.subr.mxu0 0.0
        %208 = vmatpush1.msra.mxu0 0.0
        %209 = vmatprep.subr.mxu0 0.0
        %210 = vmatpush1.msra.mxu0 0.0
        %211 = vmatprep.subr.mxu0 0.0
        %212 = vmatpush1.msra.mxu0 0.0
        %213 = vmatprep.subr.mxu0 0.0
        %214 = vmatpush1.msra.mxu0 0.0
        %215 = vmatprep.subr.mxu0 0.0
        %216 = vmatpush1.msra.mxu0 0.0
        %217 = vmatprep.subr.mxu0 0.0
        %218 = vmatpush1.msra.mxu0 0.0
        %219 = vmatprep.subr.mxu0 0.0
        %220 = vmatpush1.msra.mxu0 0.0
        %221 = vmatprep.subr.mxu0 0.0
        %222 = vmatpush1.msra.mxu0 0.0
        %223 = vmatprep.subr.mxu0 0.0
        %224 = vmatpush1.msra.mxu0 0.0
        %225 = vmatprep.subr.mxu0 0.0
        %226 = vmatpush1.msra.mxu0 0.0
        %227 = vmatprep.subr.mxu0 0.0
        %228 = vmatpush1.msra.mxu0 %v186
        %229 = vmatprep.subr.mxu0 0.0
        %230 = vmatpush1.msra.mxu0 %v185
        %231 = vmatprep.subr.mxu0 0.0
        %232 = vmatpush2.msra.mxu0 0.0
        %233 = vmatprep.subr.mxu0 0.0
        %234 = vmatpush2.msra.mxu0 0.0
        %235 = vmatprep.subr.mxu0 0.0
        %236 = vmatpush2.msra.mxu0 0.0
        %237 = vmatprep.subr.mxu0 0.0
        %238 = vmatpush2.msra.mxu0 0.0
        %239 = vmatprep.subr.mxu0 0.0
        %240 = vmatpush2.msra.mxu0 0.0
        %241 = vmatprep.subr.mxu0 0.0
        %242 = vmatpush2.msra.mxu0 0.0
        %243 = vmatprep.subr.mxu0 0.0
        %244 = vmatpush2.msra.mxu0 0.0
        %245 = vmatprep.subr.mxu0 0.0
        %246 = vmatpush2.msra.mxu0 0.0
        %247 = vmatprep.subr.mxu0 0.0
        %248 = vmatpush2.msra.mxu0 0.0
        %249 = vmatprep.subr.mxu0 0.0
        %250 = vmatpush2.msra.mxu0 0.0
        %251 = vmatprep.subr.mxu0 0.0
        %252 = vmatpush2.msra.mxu0 0.0
        %253 = vmatprep.subr.mxu0 0.0
        %254 = vmatpush2.msra.mxu0 0.0
        %255 = vmatprep.subr.mxu0 0.0
        %256 = vmatpush2.msra.mxu0 0.0
        %257 = vmatprep.subr.mxu0 0.0
        %258 = vmatpush2.msra.mxu0 0.0
        %259 = vmatprep.subr.mxu0 0.0
        %260 = vmatpush2.msra.mxu0 0.0
        %261 = vmatprep.subr.mxu0 0.0
        %262 = vmatpush2.msra.mxu0 0.0
        %263 = vmatprep.mubr.f32.mxu0 0.0
        %264 = vmatmul.mubr.f32.gmra.mxu0 %v197
        %v265 = vpop.f32.mrf.mxu0
        %v266 = vadd.f32 0.0, %v265
        %v267 = vpop.f32.mrf.mxu0
        %268 = vdwg.mxu0
        %v269 = vmul.f32 %v194, %v183
        %v270 = vsel %vm195, %v269, 0.0
        %271 = vadd.xlane.f32.xlu0 %v270
        %v272 = vpop.xlane.xlu0 %271
        %v273 = vsel %vm192, 0.0, 5.293305
        %v274 = vsub.f32 %v183, %v272
        %v275 = vmul.f32 %v274, %v266
        %v276 = vadd.f32 %v275, %v273
        %v277 = vsel %vm195, %v276, -inf
        %278 = vmax.xlane.f32.xlu0 %v277
        %v279 = vpop.xlane.xlu0 %278
        %v280 = vsub.f32 %v276, %v279
        %v281 = vmul.f32 %v280, 1.442695
        %v282 = vpow.pop %v281
        %v283 = vsel %vm195, %v282, 0.0
        %284 = vadd.xlane.f32.xlu0 %v283
        %v285 = vpop.xlane.xlu0 %284
        %v286 = vlog2.pop %v285
        %v287 = vmul.f32 %v286, 0.6931472
        %v288 = vadd.f32 %v279, %v287
        %v289 = vlaneseq
        %v290 = vshrl.u32 %v289, 7
        %s291 = smul.u32 %s17, 8
        %v292 = vstv %s291
        %v293 = vadd.s32 %v290, %v292
        %vm294 = vcmp.lt.s32.totalorder %v293, 20
        %v295 = vsel %vm294, %v288, 0.0
        %vm296 = vcmask 7168
        %v297 = vsel %vm296, %v295, 0.0
        %298 = vadd.xlane.f32.xlu0 %v297
        %v299 = vpop.xlane.xlu0 %298
        %v300 = vrot.slane %v299, 4
        %v301 = vadd.f32 %v299, %v300
        %v302 = vrot.slane %v301, 2
        %v303 = vadd.f32 %v301, %v302
        %v304 = vrot.slane %v303, 1
        %v305 = vadd.f32 %v303, %v304
        %s306 = vtos %v305
        %v307 = vstv %s306
        %308 = vst [vmem:[%s174] sm:$0xff] %v307
        %s309 = sand.u32 %s98, 1
        %s310 = scalar_lea.sflag [#allocation3], %s309
        %s311 = sand.u32 %s98, 1
        %s312 = smul.addr %s311, 8
        %s313 = scalar_lea.vmem [#allocation2], %s312
        // Predicated region
        $region33: #{tpu_custom_call.1} parent=31 // pred_check
          %p314 = pneg %p108
        $region34: #{tpu_custom_call.1} parent=31 // pred_check_branch
          %316 = sbr.rel (%p314) target = $region36
        $region35: #{tpu_custom_call.1} parent=31 // pred_region
          %s318 = ssub.s32 128, 128
          %319 = vsyncadd %s310, %s318
          %s320 = smul.addr %s17, 128
          %s321 = scalar_lea.hbm %s3, %s320
          %s323 = sshll.u32 %s313, 4
          %s324 = int_to_ptr.vmem [resolvable:$true] %s323
          %326 = dma.vmem_to_hbm [thread:$0]  %s324, 128, %s321, %s310
        $region36: #{tpu_custom_call.1} parent=31 // pred_fallthru
          _
      $region32: #{tpu_custom_call.1} parent=5 // pred_fallthru
        _
      %p327 = scmp.le.s32.totalorder 2, %s12
      // Predicated region
      $region37: #{tpu_custom_call.1} parent=5 // pred_check
        %p328 = pneg %p327
      $region38: #{tpu_custom_call.1} parent=5 // pred_check_branch
        %330 = sbr.rel (%p328) target = $region40
      $region39: #{tpu_custom_call.1} parent=5 // pred_region
        %s331 = ssub.s32 %s12, 2
        // Predicated region
        $region41: #{tpu_custom_call.1} parent=39 // pred_check
          %p332 = pneg %p114
        $region42: #{tpu_custom_call.1} parent=39 // pred_check_branch
          %334 = sbr.rel (%p332) target = $region44
        $region43: #{tpu_custom_call.1} parent=39 // pred_region
          %s335 = sand.u32 %s99, 1
          %s336 = scalar_lea.sflag [#allocation3], %s335
          %s337 = sand.u32 %s99, 1
          %s338 = smul.addr %s337, 8
          %s339 = scalar_lea.vmem [#allocation2], %s338
          %340 = dma.done %s336, 128
        $region44: #{tpu_custom_call.1} parent=39 // pred_fallthru
          _
      $region40: #{tpu_custom_call.1} parent=5 // pred_fallthru
        _
    $region6: #{tpu_custom_call.1} parent=1 // loop_footer
      %s16 = sadd.s32 1, %s12
    $region7: #{tpu_custom_call.1} parent=1 // loop_footer_branch
      %11 = sbr.rel target = $region3
    $region8: #{tpu_custom_call.1} parent=1 // loop_exit
      _
    %341 = vsyncpa [#allocation3], 1
    %s342 = scalar_lea.sflag [#allocation3], 1
    %343 = vsyncpa %s342, 1

</llo_original>
